<compile_context>
chip_gen: v5e
topology: v5e:2x2
jax: 0.10.0
libtpu: 0.0.40
codegen_flags: <defaults>
</compile_context>

<pallas_src>
import jax
import jax.numpy as jnp
from jax.experimental import pallas as pl
from jax.experimental.pallas import tpu as pltpu


def _head_kernel(x_ref, w1_ref, b1_ref, w2_ref, b2_ref, o_ref):
    # x_ref:  [tm, Dp] (bf16)     w1_ref: [Dp, Dp] (bf16)   b1_ref: [1, Dp] (f32)
    # w2_ref: [Dp, Lp] (bf16)     b2_ref: [1, Lp]  (f32)    o_ref:  [tm, Lp] (bf16)
    h = jnp.dot(x_ref[...], w1_ref[...], preferred_element_type=jnp.float32)
    h = jnp.tanh(h + b1_ref[...])
    # TODO(synk): dropout is identity in inference mode; training-mode masking
    # would use pltpu.prng_seed + pltpu.prng_random_bits here.
    out = jnp.dot(h.astype(w2_ref.dtype), w2_ref[...],
                  preferred_element_type=jnp.float32)
    out = out + b2_ref[...]
    o_ref[...] = out.astype(o_ref.dtype)


def _round_up(a, m):
    return ((a + m - 1) // m) * m


def classification_head_tanh(features, w1, b1, w2, b2, *,
                             block_batch=512, min_grid_steps=2,
                             compute_dtype=jnp.bfloat16):
    """features: [B, D]; w1: [D, D] ([in, out]); b1: [D];
    w2: [D, L] ([in, out]); b2: [L]. Returns [B, L] in features.dtype.

    Note: for tiny shapes (like the demo below) a fused XLA expression would be
    faster than any kernel; this path is meant for production batch sizes."""
    B, D = features.shape
    L = w2.shape[1]
    out_dtype = features.dtype

    # --- Lane-dense padding: D and L rounded up to 128 lanes (zeros are exact
    #     for the matmuls: padded x cols / w rows / bias entries contribute 0). ---
    Dp = _round_up(max(D, 128), 128)
    Lp = _round_up(max(L, 128), 128)

    # --- Batch tiling: tile is a multiple of the bf16 sublane packing (16 rows),
    #     and we aim for >= min_grid_steps grid steps (v7x megacore) when B allows. ---
    itemsize = jnp.dtype(compute_dtype).itemsize
    sublane_pack = {4: 8, 2: 16, 1: 32}.get(itemsize, 8)
    n_steps = max(min_grid_steps, pl.cdiv(B, block_batch))
    tm = max(sublane_pack, _round_up(pl.cdiv(B, n_steps), sublane_pack))
    B_pad = _round_up(B, tm)
    grid = (B_pad // tm,)

    x = jnp.pad(features, ((0, B_pad - B), (0, Dp - D))).astype(compute_dtype)
    w1c = jnp.pad(w1, ((0, Dp - D), (0, Dp - D))).astype(compute_dtype)
    w2c = jnp.pad(w2, ((0, Dp - D), (0, Lp - L))).astype(compute_dtype)
    b1_2d = jnp.pad(b1, (0, Dp - D)).reshape(1, Dp).astype(jnp.float32)
    b2_2d = jnp.pad(b2, (0, Lp - L)).reshape(1, Lp).astype(jnp.float32)

    # --- VMEM budget: double-buffered x/out tiles, single-buffered resident
    #     weights/biases, plus the in-kernel f32 intermediate h and its bf16 cast. ---
    vmem_bytes = (2 * tm * Dp * itemsize            # x tile (double-buffered)
                  + 2 * tm * Lp * itemsize          # out tile (double-buffered, bf16)
                  + Dp * Dp * itemsize              # w1 (single-buffered, resident)
                  + Dp * Lp * itemsize              # w2 (single-buffered, resident)
                  + (Dp + Lp) * 4                   # biases (f32)
                  + tm * Dp * 4                     # h in f32
                  + tm * Dp * itemsize)             # h cast to compute dtype
    try:
        vmem_cap = pltpu.get_tpu_info().vmem_capacity_bytes
    except Exception:
        vmem_cap = 64 * 1024 * 1024                 # conservative: v7x per-TC VMEM
    vmem_ceiling = max(vmem_cap - 16 * 1024 * 1024, 8 * 1024 * 1024)
    vmem_limit = int(min(max(int(vmem_bytes * 1.25), 4 * 1024 * 1024), vmem_ceiling))

    def _in_specs(weight_mode_kw):
        return [
            pl.BlockSpec((tm, Dp), lambda i: (i, 0)),                  # x (pipelined)
            pl.BlockSpec((Dp, Dp), lambda i: (0, 0), **weight_mode_kw),  # w1 (resident)
            pl.BlockSpec((1, Dp), lambda i: (0, 0), **weight_mode_kw),   # b1
            pl.BlockSpec((Dp, Lp), lambda i: (0, 0), **weight_mode_kw),  # w2
            pl.BlockSpec((1, Lp), lambda i: (0, 0), **weight_mode_kw),   # b2
        ]

    def _call(in_specs):
        return pl.pallas_call(
            _head_kernel,
            out_shape=jax.ShapeDtypeStruct((B_pad, Lp), compute_dtype),
            grid=grid,
            in_specs=in_specs,
            out_specs=pl.BlockSpec((tm, Lp), lambda i: (i, 0)),
            compiler_params=pltpu.CompilerParams(
                dimension_semantics=("parallel",),
                vmem_limit_bytes=vmem_limit,
            ),
        )(x, w1c, b1_2d, w2c, b2_2d)

    try:
        # Constant-index weights/biases: single-buffer them (halves resident VMEM).
        out_padded = _call(_in_specs({"pipeline_mode": pl.Buffered(buffer_count=1)}))
    except Exception:
        # TODO(synk): fall back to default (double-buffered) specs on jax versions
        # without BlockSpec.pipeline_mode support.
        out_padded = _call(_in_specs({}))

    return out_padded[:B, :L].astype(out_dtype)


if __name__ == "__main__":
    # Small, deterministic config consistent with the module:
    #   hidden_size=24, num_extra_dims=8 -> total_dims=32; num_labels=4; batch=8
    hidden_size = 24
    num_extra_dims = 8
    total_dims = hidden_size + num_extra_dims
    num_labels = 4
    batch = 8

    key = jax.random.PRNGKey(0)
    k_x, k_w1, k_b1, k_w2, k_b2 = jax.random.split(key, 5)

    features = jax.random.normal(k_x, (batch, total_dims), dtype=jnp.float32)

    # nn.Linear(total_dims, total_dims): weight [out, in] = [D, D], bias [D]
    # nn.Linear(total_dims, num_labels): weight [L, D], bias [L]
    # Pre-transpose weights to [in, out] for the kernel.
    w1_torch = jax.random.normal(k_w1, (total_dims, total_dims), jnp.float32) * 0.05
    b1 = jax.random.normal(k_b1, (total_dims,), jnp.float32) * 0.05
    w2_torch = jax.random.normal(k_w2, (num_labels, total_dims), jnp.float32) * 0.05
    b2 = jax.random.normal(k_b2, (num_labels,), jnp.float32) * 0.05

    w1 = w1_torch.T  # [D, D] (in, out)
    w2 = w2_torch.T  # [D, L] (in, out)

    out = classification_head_tanh(features, w1, b1, w2, b2)
    out = jax.block_until_ready(out)
    assert out.shape == (batch, num_labels)
    assert out.dtype == features.dtype

    # Reference 1: same bf16 cast points as the kernel (inputs, weights, h, output).
    bf = lambda a: a.astype(jnp.bfloat16).astype(jnp.float32)
    h_ref = jnp.tanh(bf(features) @ bf(w1) + b1)
    ref_bf16 = bf(bf(h_ref) @ bf(w2) + b2)
    assert jnp.allclose(out, ref_bf16, atol=1e-2, rtol=1e-2)

    # Reference 2: pure f32 math (PyTorch eval-mode forward), bf16-level tolerance.
    ref_f32 = jnp.tanh(features @ w1 + b1) @ w2 + b2
    assert jnp.allclose(out, ref_f32, atol=5e-2, rtol=5e-2)

    print("KERNEL_OK")
</pallas_src>

<mosaic_0001>
module attributes {stable_mosaic.version = 11 : i64} {
  func.func @_head_kernel(%arg0: i32, %arg1: memref<16x128xbf16, #tpu.memory_space<vmem>>, %arg2: memref<128x128xbf16, #tpu.memory_space<vmem>>, %arg3: memref<1x128xf32, #tpu.memory_space<vmem>>, %arg4: memref<128x128xbf16, #tpu.memory_space<vmem>>, %arg5: memref<1x128xf32, #tpu.memory_space<vmem>>, %arg6: memref<16x128xbf16, #tpu.memory_space<vmem>>) attributes {dimension_semantics = [#tpu.dimension_semantics<parallel>], iteration_bounds = array<i64: 1>, scalar_prefetch = 0 : i64, scratch_operands = 0 : i64, tpu.core_type = #tpu.core_type<tc>, window_params = [{transform_indices = @transform_0, window_bounds = array<i64: 16, 128>}, {pipeline_mode = #tpu.pipeline_mode<synchronous>, transform_indices = @transform_1, window_bounds = array<i64: 128, 128>}, {pipeline_mode = #tpu.pipeline_mode<synchronous>, transform_indices = @transform_2, window_bounds = array<i64: 1, 128>}, {pipeline_mode = #tpu.pipeline_mode<synchronous>, transform_indices = @transform_3, window_bounds = array<i64: 128, 128>}, {pipeline_mode = #tpu.pipeline_mode<synchronous>, transform_indices = @transform_4, window_bounds = array<i64: 1, 128>}, {transform_indices = @transform_5, window_bounds = array<i64: 16, 128>}]} {
    %c0 = arith.constant 0 : index
    %c0_0 = arith.constant 0 : index
    %0 = vector.load %arg1[%c0, %c0_0] : memref<16x128xbf16, #tpu.memory_space<vmem>>, vector<16x128xbf16>
    %c0_1 = arith.constant 0 : index
    %c0_2 = arith.constant 0 : index
    %1 = vector.load %arg2[%c0_1, %c0_2] : memref<128x128xbf16, #tpu.memory_space<vmem>>, vector<128x128xbf16>
    %cst = arith.constant dense<0.000000e+00> : vector<16x128xf32>
    %2 = tpu.matmul %0, %1, %cst {dimension_numbers = #tpu.dot_dimension_numbers<[1], [0], [0], [1], [0, 0, 1, 1], [], []>} : vector<16x128xbf16>, vector<128x128xbf16>, vector<16x128xf32> -> vector<16x128xf32>
    %c0_3 = arith.constant 0 : index
    %c0_4 = arith.constant 0 : index
    %3 = vector.load %arg3[%c0_3, %c0_4] : memref<1x128xf32, #tpu.memory_space<vmem>>, vector<1x128xf32>
    %4 = vector.broadcast %3 : vector<1x128xf32> to vector<16x128xf32>
    %5 = arith.addf %2, %4 : vector<16x128xf32>
    %6 = math.tanh %5 : vector<16x128xf32>
    %7 = arith.truncf %6 : vector<16x128xf32> to vector<16x128xbf16>
    %c0_5 = arith.constant 0 : index
    %c0_6 = arith.constant 0 : index
    %8 = vector.load %arg4[%c0_5, %c0_6] : memref<128x128xbf16, #tpu.memory_space<vmem>>, vector<128x128xbf16>
    %cst_7 = arith.constant dense<0.000000e+00> : vector<16x128xf32>
    %9 = tpu.matmul %7, %8, %cst_7 {dimension_numbers = #tpu.dot_dimension_numbers<[1], [0], [0], [1], [0, 0, 1, 1], [], []>} : vector<16x128xbf16>, vector<128x128xbf16>, vector<16x128xf32> -> vector<16x128xf32>
    %c0_8 = arith.constant 0 : index
    %c0_9 = arith.constant 0 : index
    %10 = vector.load %arg5[%c0_8, %c0_9] : memref<1x128xf32, #tpu.memory_space<vmem>>, vector<1x128xf32>
    %11 = vector.broadcast %10 : vector<1x128xf32> to vector<16x128xf32>
    %12 = arith.addf %9, %11 : vector<16x128xf32>
    %13 = arith.truncf %12 : vector<16x128xf32> to vector<16x128xbf16>
    %c0_10 = arith.constant 0 : index
    %c0_11 = arith.constant 0 : index
    %14 = vector.load %arg6[%c0_10, %c0_11] : memref<16x128xbf16, #tpu.memory_space<vmem>>, vector<16x128xbf16>
    tpu.vector_store %arg6[%c0_10, %c0_11], %13 {strides = array<i32>} : memref<16x128xbf16, #tpu.memory_space<vmem>>, vector<16x128xbf16>,
    return
  }
  func.func @transform_0(%arg0: i32) -> (i32, i32) {
    %c0_i32 = arith.constant 0 : i32
    %c0_i32_0 = arith.constant 0 : i32
    return %arg0, %c0_i32 : i32, i32
  }
  func.func @transform_1(%arg0: i32) -> (i32, i32) {
    %c0_i32 = arith.constant 0 : i32
    %c0_i32_0 = arith.constant 0 : i32
    %c0_i32_1 = arith.constant 0 : i32
    return %c0_i32, %c0_i32_0 : i32, i32
  }
  func.func @transform_2(%arg0: i32) -> (i32, i32) {
    %c0_i32 = arith.constant 0 : i32
    %c0_i32_0 = arith.constant 0 : i32
    %c0_i32_1 = arith.constant 0 : i32
    return %c0_i32, %c0_i32_0 : i32, i32
  }
  func.func @transform_3(%arg0: i32) -> (i32, i32) {
    %c0_i32 = arith.constant 0 : i32
    %c0_i32_0 = arith.constant 0 : i32
    %c0_i32_1 = arith.constant 0 : i32
    return %c0_i32, %c0_i32_0 : i32, i32
  }
  func.func @transform_4(%arg0: i32) -> (i32, i32) {
    %c0_i32 = arith.constant 0 : i32
    %c0_i32_0 = arith.constant 0 : i32
    %c0_i32_1 = arith.constant 0 : i32
    return %c0_i32, %c0_i32_0 : i32, i32
  }
  func.func @transform_5(%arg0: i32) -> (i32, i32) {
    %c0_i32 = arith.constant 0 : i32
    %c0_i32_0 = arith.constant 0 : i32
    return %arg0, %c0_i32 : i32, i32
  }
}

module attributes {stable_mosaic.version = 11 : i64} {
  func.func @_head_kernel(%arg0: i32, %arg1: memref<16x128xbf16, #tpu.memory_space<vmem>>, %arg2: memref<128x128xbf16, #tpu.memory_space<vmem>>, %arg3: memref<1x128xf32, #tpu.memory_space<vmem>>, %arg4: memref<128x128xbf16, #tpu.memory_space<vmem>>, %arg5: memref<1x128xf32, #tpu.memory_space<vmem>>, %arg6: memref<16x128xbf16, #tpu.memory_space<vmem>>) attributes {dimension_semantics = [#tpu.dimension_semantics<parallel>], iteration_bounds = array<i64: 1>, scalar_prefetch = 0 : i64, scratch_operands = 0 : i64, tpu.core_type = #tpu.core_type<tc>, window_params = [{transform_indices = @transform_0, window_bounds = array<i64: 16, 128>}, {pipeline_mode = #tpu.pipeline_mode<synchronous>, transform_indices = @transform_1, window_bounds = array<i64: 128, 128>}, {pipeline_mode = #tpu.pipeline_mode<synchronous>, transform_indices = @transform_2, window_bounds = array<i64: 1, 128>}, {pipeline_mode = #tpu.pipeline_mode<synchronous>, transform_indices = @transform_3, window_bounds = array<i64: 128, 128>}, {pipeline_mode = #tpu.pipeline_mode<synchronous>, transform_indices = @transform_4, window_bounds = array<i64: 1, 128>}, {transform_indices = @transform_5, window_bounds = array<i64: 16, 128>}]} {
    %c0 = arith.constant 0 : index
    %c0_0 = arith.constant 0 : index
    %0 = vector.load %arg1[%c0, %c0_0] : memref<16x128xbf16, #tpu.memory_space<vmem>>, vector<16x128xbf16>
    %c0_1 = arith.constant 0 : index
    %c0_2 = arith.constant 0 : index
    %1 = vector.load %arg2[%c0_1, %c0_2] : memref<128x128xbf16, #tpu.memory_space<vmem>>, vector<128x128xbf16>
    %cst = arith.constant dense<0.000000e+00> : vector<16x128xf32>
    %2 = tpu.matmul %0, %1, %cst {dimension_numbers = #tpu.dot_dimension_numbers<[1], [0], [0], [1], [0, 0, 1, 1], [], []>} : vector<16x128xbf16>, vector<128x128xbf16>, vector<16x128xf32> -> vector<16x128xf32>
    %c0_3 = arith.constant 0 : index
    %c0_4 = arith.constant 0 : index
    %3 = vector.load %arg3[%c0_3, %c0_4] : memref<1x128xf32, #tpu.memory_space<vmem>>, vector<1x128xf32>
    %4 = vector.broadcast %3 : vector<1x128xf32> to vector<16x128xf32>
    %5 = arith.addf %2, %4 : vector<16x128xf32>
    %6 = math.tanh %5 : vector<16x128xf32>
    %7 = arith.truncf %6 : vector<16x128xf32> to vector<16x128xbf16>
    %c0_5 = arith.constant 0 : index
    %c0_6 = arith.constant 0 : index
    %8 = vector.load %arg4[%c0_5, %c0_6] : memref<128x128xbf16, #tpu.memory_space<vmem>>, vector<128x128xbf16>
    %cst_7 = arith.constant dense<0.000000e+00> : vector<16x128xf32>
    %9 = tpu.matmul %7, %8, %cst_7 {dimension_numbers = #tpu.dot_dimension_numbers<[1], [0], [0], [1], [0, 0, 1, 1], [], []>} : vector<16x128xbf16>, vector<128x128xbf16>, vector<16x128xf32> -> vector<16x128xf32>
    %c0_8 = arith.constant 0 : index
    %c0_9 = arith.constant 0 : index
    %10 = vector.load %arg5[%c0_8, %c0_9] : memref<1x128xf32, #tpu.memory_space<vmem>>, vector<1x128xf32>
    %11 = vector.broadcast %10 : vector<1x128xf32> to vector<16x128xf32>
    %12 = arith.addf %9, %11 : vector<16x128xf32>
    %13 = arith.truncf %12 : vector<16x128xf32> to vector<16x128xbf16>
    %c0_10 = arith.constant 0 : index
    %c0_11 = arith.constant 0 : index
    %14 = vector.load %arg6[%c0_10, %c0_11] : memref<16x128xbf16, #tpu.memory_space<vmem>>, vector<16x128xbf16>
    tpu.vector_store %arg6[%c0_10, %c0_11], %13 {strides = array<i32>} : memref<16x128xbf16, #tpu.memory_space<vmem>>, vector<16x128xbf16>,
    return
  }
  func.func @transform_0(%arg0: i32) -> (i32, i32) {
    %c0_i32 = arith.constant 0 : i32
    %c0_i32_0 = arith.constant 0 : i32
    return %arg0, %c0_i32 : i32, i32
  }
  func.func @transform_1(%arg0: i32) -> (i32, i32) {
    %c0_i32 = arith.constant 0 : i32
    %c0_i32_0 = arith.constant 0 : i32
    %c0_i32_1 = arith.constant 0 : i32
    return %c0_i32, %c0_i32_0 : i32, i32
  }
  func.func @transform_2(%arg0: i32) -> (i32, i32) {
    %c0_i32 = arith.constant 0 : i32
    %c0_i32_0 = arith.constant 0 : i32
    %c0_i32_1 = arith.constant 0 : i32
    return %c0_i32, %c0_i32_0 : i32, i32
  }
  func.func @transform_3(%arg0: i32) -> (i32, i32) {
    %c0_i32 = arith.constant 0 : i32
    %c0_i32_0 = arith.constant 0 : i32
    %c0_i32_1 = arith.constant 0 : i32
    return %c0_i32, %c0_i32_0 : i32, i32
  }
  func.func @transform_4(%arg0: i32) -> (i32, i32) {
    %c0_i32 = arith.constant 0 : i32
    %c0_i32_0 = arith.constant 0 : i32
    %c0_i32_1 = arith.constant 0 : i32
    return %c0_i32, %c0_i32_0 : i32, i32
  }
  func.func @transform_5(%arg0: i32) -> (i32, i32) {
    %c0_i32 = arith.constant 0 : i32
    %c0_i32_0 = arith.constant 0 : i32
    return %arg0, %c0_i32 : i32, i32
  }
}

</mosaic_0001>

<llo_original>
// kernel: tpu_custom_call.1
$region0: #{tpu_custom_call.1}
  #allocation0 [shape = 'u32[]', space=smem, size = 0x4, offset = 0x4, fixed_abs, tag = 'smem constant byte address 0x4 - core index']
  #allocation1 [shape = 'u32[72,128]{1,0:T(1,128)}', space=vmem, size = 0x9000, scoped, tag = 'internal scratch']
  %s0 = inlined_call_operand.hbm [shape: bf16[16,128], index: 0, kind: input, shape index: {}]
  %s1 = inlined_call_operand.hbm [shape: bf16[128,128], index: 1, kind: input, shape index: {}]
  %s2 = inlined_call_operand.vmem [shape: f32[1,128], index: 2, kind: input, shape index: {}]
  %s3 = inlined_call_operand.hbm [shape: bf16[128,128], index: 3, kind: input, shape index: {}]
  %s4 = inlined_call_operand.vmem [shape: f32[1,128], index: 4, kind: input, shape index: {}]
  %s5 = inlined_call_operand.hbm [shape: bf16[16,128], index: 5, kind: output, shape index: {}]
  %s6 = sld [smem:[#allocation0]]
  $region42: #{tpu_custom_call.1} parent=0
    _
  %s8 = ssub.s32 1, %s6
  %s9 = scalar_select 0, %s8, %s6
  $region1: #{tpu_custom_call.1} parent=0
    #allocation2 [shape = 'u8[4096]{0}', space=vmem, size = 0x1000, scoped, tag = 'input window, operand 0, single buffered']
    #allocation3 [shape = 's32[1]{0}', space=sflag, size = 0x4, scoped, tag = 'scoped memory for tpu_custom_call.1']
    #allocation4 [shape = 's32[1]{0}', space=sflag, size = 0x4, scoped, tag = 'scoped memory for tpu_custom_call.1']
    #allocation5 [shape = 'u8[32768]{0}', space=vmem, size = 0x8000, scoped, tag = 'input window, operand 1, single buffered']
    #allocation6 [shape = 's32[1]{0}', space=sflag, size = 0x4, scoped, tag = 'scoped memory for tpu_custom_call.1']
    #allocation7 [shape = 'u8[32768]{0}', space=vmem, size = 0x8000, scoped, tag = 'input window, operand 3, single buffered']
    #allocation8 [shape = 'u8[4096]{0}', space=vmem, size = 0x1000, scoped, tag = 'output window, operand 0, single buffered']
    %10 = vsyncpa [#allocation3], 0
    %11 = vsyncpa [#allocation6], 0
    %12 = vsyncpa [#allocation4], 0
    // Predicated region
    $region2: #{tpu_custom_call.1} parent=1 // pred_check
      _
    $region3: #{tpu_custom_call.1} parent=1 // pred_check_branch
      %14 = sbr.rel (0) target = $region5
    $region4: #{tpu_custom_call.1} parent=1 // pred_region
      %16 = vsyncadd [#allocation3], 0
      %s17 = sshll.u32 %s0, 4
      %s18 = int_to_ptr.hbm [resolvable:$true] %s17
      %s19 = sshll.u32 [#allocation2], 4
      %s20 = int_to_ptr.vmem [resolvable:$true] %s19
      %25 = dma.hbm_to_vmem [thread:$0]  %s18, 128, %s20, [#allocation3], 64, 64, 4
    $region5: #{tpu_custom_call.1} parent=1 // pred_fallthru
      _
    // Predicated region
    $region6: #{tpu_custom_call.1} parent=1 // pred_check
      _
    $region7: #{tpu_custom_call.1} parent=1 // pred_check_branch
      %27 = sbr.rel (0) target = $region9
    $region8: #{tpu_custom_call.1} parent=1 // pred_region
      %29 = vsyncadd [#allocation6], 0
      %s30 = sshll.u32 %s1, 4
      %s31 = int_to_ptr.hbm [resolvable:$true] %s30
      %s32 = sshll.u32 [#allocation5], 4
      %s33 = int_to_ptr.vmem [resolvable:$true] %s32
      %38 = dma.hbm_to_vmem [thread:$0]  %s31, 1024, %s33, [#allocation6], 64, 64, 4
    $region9: #{tpu_custom_call.1} parent=1 // pred_fallthru
      _
    // Predicated region
    $region10: #{tpu_custom_call.1} parent=1 // pred_check
      _
    $region11: #{tpu_custom_call.1} parent=1 // pred_check_branch
      %40 = sbr.rel (0) target = $region13
    $region12: #{tpu_custom_call.1} parent=1 // pred_region
      _
    $region13: #{tpu_custom_call.1} parent=1 // pred_fallthru
      _
    // Predicated region
    $region14: #{tpu_custom_call.1} parent=1 // pred_check
      _
    $region15: #{tpu_custom_call.1} parent=1 // pred_check_branch
      %42 = sbr.rel (0) target = $region17
    $region16: #{tpu_custom_call.1} parent=1 // pred_region
      %44 = vsyncadd [#allocation6], 0
      %s45 = sshll.u32 %s3, 4
      %s46 = int_to_ptr.hbm [resolvable:$true] %s45
      %s47 = sshll.u32 [#allocation7], 4
      %s48 = int_to_ptr.vmem [resolvable:$true] %s47
      %53 = dma.hbm_to_vmem [thread:$0]  %s46, 1024, %s48, [#allocation6], 64, 64, 4
    $region17: #{tpu_custom_call.1} parent=1 // pred_fallthru
      _
    // Predicated region
    $region18: #{tpu_custom_call.1} parent=1 // pred_check
      _
    $region19: #{tpu_custom_call.1} parent=1 // pred_check_branch
      %55 = sbr.rel (0) target = $region21
    $region20: #{tpu_custom_call.1} parent=1 // pred_region
      _
    $region21: #{tpu_custom_call.1} parent=1 // pred_fallthru
      _
    // Predicated region
    $region22: #{tpu_custom_call.1} parent=1 // pred_check
      _
    $region23: #{tpu_custom_call.1} parent=1 // pred_check_branch
      %57 = sbr.rel (0) target = $region25
    $region24: #{tpu_custom_call.1} parent=1 // pred_region
      %59 = dma.done [#allocation3], 128
    $region25: #{tpu_custom_call.1} parent=1 // pred_fallthru
      _
    // Predicated region
    $region26: #{tpu_custom_call.1} parent=1 // pred_check
      _
    $region27: #{tpu_custom_call.1} parent=1 // pred_check_branch
      %61 = sbr.rel (0) target = $region29
    $region28: #{tpu_custom_call.1} parent=1 // pred_region
      %63 = dma.done [#allocation6], 1024
    $region29: #{tpu_custom_call.1} parent=1 // pred_fallthru
      _
    // Predicated region
    $region30: #{tpu_custom_call.1} parent=1 // pred_check
      _
    $region31: #{tpu_custom_call.1} parent=1 // pred_check_branch
      %65 = sbr.rel (0) target = $region33
    $region32: #{tpu_custom_call.1} parent=1 // pred_region
      %67 = dma.done [#allocation6], 1024
    $region33: #{tpu_custom_call.1} parent=1 // pred_fallthru
      _
    %v68 = vld [vmem:[#allocation2] sm:$0xf]
    %v69 = vld [vmem:[#allocation2 + $0x4] sm:$0xf]
    %v70 = vld [vmem:[#allocation5] sm:$0xf]
    %v71 = vld [vmem:[#allocation5 + $0x4] sm:$0xf]
    %v72 = vld [vmem:[#allocation5 + $0x8] sm:$0xf]
    %v73 = vld [vmem:[#allocation5 + $0xc] sm:$0xf]
    %v74 = vld [vmem:[#allocation5 + $0x10] sm:$0xf]
    %v75 = vld [vmem:[#allocation5 + $0x14] sm:$0xf]
    %v76 = vld [vmem:[#allocation5 + $0x18] sm:$0xf]
    %v77 = vld [vmem:[#allocation5 + $0x1c] sm:$0xf]
    %v78 = vld [vmem:[#allocation5 + $0x20] sm:$0xf]
    %v79 = vld [vmem:[#allocation5 + $0x24] sm:$0xf]
    %v80 = vld [vmem:[#allocation5 + $0x28] sm:$0xf]
    %v81 = vld [vmem:[#allocation5 + $0x2c] sm:$0xf]
    %v82 = vld [vmem:[#allocation5 + $0x30] sm:$0xf]
    %v83 = vld [vmem:[#allocation5 + $0x34] sm:$0xf]
    %v84 = vld [vmem:[#allocation5 + $0x38] sm:$0xf]
    %v85 = vld [vmem:[#allocation5 + $0x3c] sm:$0xf]
    %v86 = vld [vmem:[%s2] sm:$0x1]
    %v88 = vperm.slane %v86, 0
    %v92 = vunpack.c.l.b16 %v68
    %v93 = vunpack.c.l.b16 %v69
    %v94 = vpack.c.b16 %v93, %v92
    %v112 = vunpack.c.l.b16 %v70
    %v113 = vunpack.c.l.b16 %v71
    %v114 = vunpack.c.l.b16 %v72
    %v115 = vunpack.c.l.b16 %v73
    %v116 = vunpack.c.l.b16 %v74
    %v117 = vunpack.c.l.b16 %v75
    %v118 = vunpack.c.l.b16 %v76
    %v119 = vunpack.c.l.b16 %v77
    %v120 = vunpack.c.l.b16 %v78
    %v121 = vunpack.c.l.b16 %v79
    %v122 = vunpack.c.l.b16 %v80
    %v123 = vunpack.c.l.b16 %v81
    %v124 = vunpack.c.l.b16 %v82
    %v125 = vunpack.c.l.b16 %v83
    %v126 = vunpack.c.l.b16 %v84
    %v127 = vunpack.c.l.b16 %v85
    %v128 = vpack.c.b16 %v113, %v112
    %v129 = vpack.c.b16 %v115, %v114
    %v130 = vpack.c.b16 %v117, %v116
    %v131 = vpack.c.b16 %v119, %v118
    %v132 = vpack.c.b16 %v121, %v120
    %v133 = vpack.c.b16 %v123, %v122
    %v134 = vpack.c.b16 %v125, %v124
    %v135 = vpack.c.b16 %v127, %v126
    %144 = vmatpush.bf16.msra.mxu0 %v135
    %145 = vmatpush.bf16.msra.mxu0 %v134
    %146 = vmatpush.bf16.msra.mxu0 %v133
    %147 = vmatpush.bf16.msra.mxu0 %v132
    %148 = vmatpush.bf16.msra.mxu0 %v131
    %149 = vmatpush.bf16.msra.mxu0 %v130
    %150 = vmatpush.bf16.msra.mxu0 %v129
    %151 = vmatpush.bf16.msra.mxu0 %v128
    %152 = vmatmul.bf16.gmra.mxu0 %v94
    %v153 = vpop.f32.mrf.mxu0
    %v154 = vadd.f32 %v88, %v153
    %v155 = vpop.f32.mrf.mxu0
    %v156 = vadd.f32 %v88, %v155
    %157 = vdwg.mxu0
    %v158 = vtanh.pop %v154
    %v159 = vtanh.pop %v156
    %v160 = vpack.c.bf16 %v159, %v158
    %v161 = vld [vmem:[#allocation7] sm:$0xf]
    %v162 = vld [vmem:[#allocation7 + $0x4] sm:$0xf]
    %v163 = vld [vmem:[#allocation7 + $0x8] sm:$0xf]
    %v164 = vld [vmem:[#allocation7 + $0xc] sm:$0xf]
    %v165 = vld [vmem:[#allocation7 + $0x10] sm:$0xf]
    %v166 = vld [vmem:[#allocation7 + $0x14] sm:$0xf]
    %v167 = vld [vmem:[#allocation7 + $0x18] sm:$0xf]
    %v168 = vld [vmem:[#allocation7 + $0x1c] sm:$0xf]
    %v169 = vld [vmem:[#allocation7 + $0x20] sm:$0xf]
    %v170 = vld [vmem:[#allocation7 + $0x24] sm:$0xf]
    %v171 = vld [vmem:[#allocation7 + $0x28] sm:$0xf]
    %v172 = vld [vmem:[#allocation7 + $0x2c] sm:$0xf]
    %v173 = vld [vmem:[#allocation7 + $0x30] sm:$0xf]
    %v174 = vld [vmem:[#allocation7 + $0x34] sm:$0xf]
    %v175 = vld [vmem:[#allocation7 + $0x38] sm:$0xf]
    %v176 = vld [vmem:[#allocation7 + $0x3c] sm:$0xf]
    %v177 = vld [vmem:[%s4] sm:$0x1]
    %v179 = vperm.slane %v177, 0
    %v197 = vunpack.c.l.b16 %v161
    %v198 = vunpack.c.l.b16 %v162
    %v199 = vunpack.c.l.b16 %v163
    %v200 = vunpack.c.l.b16 %v164
    %v201 = vunpack.c.l.b16 %v165
    %v202 = vunpack.c.l.b16 %v166
    %v203 = vunpack.c.l.b16 %v167
    %v204 = vunpack.c.l.b16 %v168
    %v205 = vunpack.c.l.b16 %v169
    %v206 = vunpack.c.l.b16 %v170
    %v207 = vunpack.c.l.b16 %v171
    %v208 = vunpack.c.l.b16 %v172
    %v209 = vunpack.c.l.b16 %v173
    %v210 = vunpack.c.l.b16 %v174
    %v211 = vunpack.c.l.b16 %v175
    %v212 = vunpack.c.l.b16 %v176
    %v213 = vpack.c.b16 %v198, %v197
    %v214 = vpack.c.b16 %v200, %v199
    %v215 = vpack.c.b16 %v202, %v201
    %v216 = vpack.c.b16 %v204, %v203
    %v217 = vpack.c.b16 %v206, %v205
    %v218 = vpack.c.b16 %v208, %v207
    %v219 = vpack.c.b16 %v210, %v209
    %v220 = vpack.c.b16 %v212, %v211
    %229 = vmatpush.bf16.msra.mxu0 %v220
    %230 = vmatpush.bf16.msra.mxu0 %v219
    %231 = vmatpush.bf16.msra.mxu0 %v218
    %232 = vmatpush.bf16.msra.mxu0 %v217
    %233 = vmatpush.bf16.msra.mxu0 %v216
    %234 = vmatpush.bf16.msra.mxu0 %v215
    %235 = vmatpush.bf16.msra.mxu0 %v214
    %236 = vmatpush.bf16.msra.mxu0 %v213
    %237 = vmatmul.bf16.gmra.mxu0 %v160
    %v238 = vpop.f32.mrf.mxu0
    %v239 = vadd.f32 %v179, %v238
    %v240 = vpop.f32.mrf.mxu0
    %v241 = vadd.f32 %v179, %v240
    %242 = vdwg.mxu0
    %v243 = vpack.c.bf16 %v239, %v239
    %v244 = vpack.c.bf16 %v241, %v241
    %245 = vst [vmem:[#allocation8] sm:$0xf] %v243
    %246 = vst [vmem:[#allocation8 + $0x4] sm:$0xf] %v244
    // Predicated region
    $region34: #{tpu_custom_call.1} parent=1 // pred_check
      _
    $region35: #{tpu_custom_call.1} parent=1 // pred_check_branch
      %248 = sbr.rel (0) target = $region37
    $region36: #{tpu_custom_call.1} parent=1 // pred_region
      %250 = vsyncadd [#allocation4], 0
      %s251 = sshll.u32 [#allocation8], 4
      %s252 = int_to_ptr.vmem [resolvable:$true] %s251
      %s253 = sshll.u32 %s5, 4
      %s254 = int_to_ptr.hbm [resolvable:$true] %s253
      %259 = dma.vmem_to_hbm [thread:$0]  %s252, 128, %s254, [#allocation4], 64, 64, 4
    $region37: #{tpu_custom_call.1} parent=1 // pred_fallthru
      _
    // Predicated region
    $region38: #{tpu_custom_call.1} parent=1 // pred_check
      _
    $region39: #{tpu_custom_call.1} parent=1 // pred_check_branch
      %261 = sbr.rel (0) target = $region41
    $region40: #{tpu_custom_call.1} parent=1 // pred_region
      %263 = dma.done [#allocation4], 128
    $region41: #{tpu_custom_call.1} parent=1 // pred_fallthru
      _
    %264 = vsyncpa [#allocation3], 1
    %265 = vsyncpa [#allocation6], 1
    %266 = vsyncpa [#allocation4], 1

// kernel: tpu_custom_call.1
$region0: #{tpu_custom_call.1}
  #allocation0 [shape = 'u32[]', space=smem, size = 0x4, offset = 0x4, fixed_abs, tag = 'smem constant byte address 0x4 - core index']
  #allocation1 [shape = 'u32[72,128]{1,0:T(1,128)}', space=vmem, size = 0x9000, scoped, tag = 'internal scratch']
  %s0 = inlined_call_operand.hbm [shape: bf16[16,128], index: 0, kind: input, shape index: {}]
  %s1 = inlined_call_operand.hbm [shape: bf16[128,128], index: 1, kind: input, shape index: {}]
  %s2 = inlined_call_operand.vmem [shape: f32[1,128], index: 2, kind: input, shape index: {}]
  %s3 = inlined_call_operand.hbm [shape: bf16[128,128], index: 3, kind: input, shape index: {}]
  %s4 = inlined_call_operand.vmem [shape: f32[1,128], index: 4, kind: input, shape index: {}]
  %s5 = inlined_call_operand.hbm [shape: bf16[16,128], index: 5, kind: output, shape index: {}]
  %s6 = sld [smem:[#allocation0]]
  $region42: #{tpu_custom_call.1} parent=0
    _
  %s8 = ssub.s32 1, %s6
  %s9 = scalar_select 0, %s8, %s6
  $region1: #{tpu_custom_call.1} parent=0
    #allocation2 [shape = 'u8[4096]{0}', space=vmem, size = 0x1000, scoped, tag = 'input window, operand 0, single buffered']
    #allocation3 [shape = 's32[1]{0}', space=sflag, size = 0x4, scoped, tag = 'scoped memory for tpu_custom_call.1']
    #allocation4 [shape = 's32[1]{0}', space=sflag, size = 0x4, scoped, tag = 'scoped memory for tpu_custom_call.1']
    #allocation5 [shape = 'u8[32768]{0}', space=vmem, size = 0x8000, scoped, tag = 'input window, operand 1, single buffered']
    #allocation6 [shape = 's32[1]{0}', space=sflag, size = 0x4, scoped, tag = 'scoped memory for tpu_custom_call.1']
    #allocation7 [shape = 'u8[32768]{0}', space=vmem, size = 0x8000, scoped, tag = 'input window, operand 3, single buffered']
    #allocation8 [shape = 'u8[4096]{0}', space=vmem, size = 0x1000, scoped, tag = 'output window, operand 0, single buffered']
    %10 = vsyncpa [#allocation3], 0
    %11 = vsyncpa [#allocation6], 0
    %12 = vsyncpa [#allocation4], 0
    // Predicated region
    $region2: #{tpu_custom_call.1} parent=1 // pred_check
      _
    $region3: #{tpu_custom_call.1} parent=1 // pred_check_branch
      %14 = sbr.rel (0) target = $region5
    $region4: #{tpu_custom_call.1} parent=1 // pred_region
      %16 = vsyncadd [#allocation3], 0
      %s17 = sshll.u32 %s0, 4
      %s18 = int_to_ptr.hbm [resolvable:$true] %s17
      %s19 = sshll.u32 [#allocation2], 4
      %s20 = int_to_ptr.vmem [resolvable:$true] %s19
      %25 = dma.hbm_to_vmem [thread:$0]  %s18, 128, %s20, [#allocation3], 64, 64, 4
    $region5: #{tpu_custom_call.1} parent=1 // pred_fallthru
      _
    // Predicated region
    $region6: #{tpu_custom_call.1} parent=1 // pred_check
      _
    $region7: #{tpu_custom_call.1} parent=1 // pred_check_branch
      %27 = sbr.rel (0) target = $region9
    $region8: #{tpu_custom_call.1} parent=1 // pred_region
      %29 = vsyncadd [#allocation6], 0
      %s30 = sshll.u32 %s1, 4
      %s31 = int_to_ptr.hbm [resolvable:$true] %s30
      %s32 = sshll.u32 [#allocation5], 4
      %s33 = int_to_ptr.vmem [resolvable:$true] %s32
      %38 = dma.hbm_to_vmem [thread:$0]  %s31, 1024, %s33, [#allocation6], 64, 64, 4
    $region9: #{tpu_custom_call.1} parent=1 // pred_fallthru
      _
    // Predicated region
    $region10: #{tpu_custom_call.1} parent=1 // pred_check
      _
    $region11: #{tpu_custom_call.1} parent=1 // pred_check_branch
      %40 = sbr.rel (0) target = $region13
    $region12: #{tpu_custom_call.1} parent=1 // pred_region
      _
    $region13: #{tpu_custom_call.1} parent=1 // pred_fallthru
      _
    // Predicated region
    $region14: #{tpu_custom_call.1} parent=1 // pred_check
      _
    $region15: #{tpu_custom_call.1} parent=1 // pred_check_branch
      %42 = sbr.rel (0) target = $region17
    $region16: #{tpu_custom_call.1} parent=1 // pred_region
      %44 = vsyncadd [#allocation6], 0
      %s45 = sshll.u32 %s3, 4
      %s46 = int_to_ptr.hbm [resolvable:$true] %s45
      %s47 = sshll.u32 [#allocation7], 4
      %s48 = int_to_ptr.vmem [resolvable:$true] %s47
      %53 = dma.hbm_to_vmem [thread:$0]  %s46, 1024, %s48, [#allocation6], 64, 64, 4
    $region17: #{tpu_custom_call.1} parent=1 // pred_fallthru
      _
    // Predicated region
    $region18: #{tpu_custom_call.1} parent=1 // pred_check
      _
    $region19: #{tpu_custom_call.1} parent=1 // pred_check_branch
      %55 = sbr.rel (0) target = $region21
    $region20: #{tpu_custom_call.1} parent=1 // pred_region
      _
    $region21: #{tpu_custom_call.1} parent=1 // pred_fallthru
      _
    // Predicated region
    $region22: #{tpu_custom_call.1} parent=1 // pred_check
      _
    $region23: #{tpu_custom_call.1} parent=1 // pred_check_branch
      %57 = sbr.rel (0) target = $region25
    $region24: #{tpu_custom_call.1} parent=1 // pred_region
      %59 = dma.done [#allocation3], 128
    $region25: #{tpu_custom_call.1} parent=1 // pred_fallthru
      _
    // Predicated region
    $region26: #{tpu_custom_call.1} parent=1 // pred_check
      _
    $region27: #{tpu_custom_call.1} parent=1 // pred_check_branch
      %61 = sbr.rel (0) target = $region29
    $region28: #{tpu_custom_call.1} parent=1 // pred_region
      %63 = dma.done [#allocation6], 1024
    $region29: #{tpu_custom_call.1} parent=1 // pred_fallthru
      _
    // Predicated region
    $region30: #{tpu_custom_call.1} parent=1 // pred_check
      _
    $region31: #{tpu_custom_call.1} parent=1 // pred_check_branch
      %65 = sbr.rel (0) target = $region33
    $region32: #{tpu_custom_call.1} parent=1 // pred_region
      %67 = dma.done [#allocation6], 1024
    $region33: #{tpu_custom_call.1} parent=1 // pred_fallthru
      _
    %v68 = vld [vmem:[#allocation2] sm:$0xf]
    %v69 = vld [vmem:[#allocation2 + $0x4] sm:$0xf]
    %v70 = vld [vmem:[#allocation5] sm:$0xf]
    %v71 = vld [vmem:[#allocation5 + $0x4] sm:$0xf]
    %v72 = vld [vmem:[#allocation5 + $0x8] sm:$0xf]
    %v73 = vld [vmem:[#allocation5 + $0xc] sm:$0xf]
    %v74 = vld [vmem:[#allocation5 + $0x10] sm:$0xf]
    %v75 = vld [vmem:[#allocation5 + $0x14] sm:$0xf]
    %v76 = vld [vmem:[#allocation5 + $0x18] sm:$0xf]
    %v77 = vld [vmem:[#allocation5 + $0x1c] sm:$0xf]
    %v78 = vld [vmem:[#allocation5 + $0x20] sm:$0xf]
    %v79 = vld [vmem:[#allocation5 + $0x24] sm:$0xf]
    %v80 = vld [vmem:[#allocation5 + $0x28] sm:$0xf]
    %v81 = vld [vmem:[#allocation5 + $0x2c] sm:$0xf]
    %v82 = vld [vmem:[#allocation5 + $0x30] sm:$0xf]
    %v83 = vld [vmem:[#allocation5 + $0x34] sm:$0xf]
    %v84 = vld [vmem:[#allocation5 + $0x38] sm:$0xf]
    %v85 = vld [vmem:[#allocation5 + $0x3c] sm:$0xf]
    %v86 = vld [vmem:[%s2] sm:$0x1]
    %v88 = vperm.slane %v86, 0
    %v92 = vunpack.c.l.b16 %v68
    %v93 = vunpack.c.l.b16 %v69
    %v94 = vpack.c.b16 %v93, %v92
    %v112 = vunpack.c.l.b16 %v70
    %v113 = vunpack.c.l.b16 %v71
    %v114 = vunpack.c.l.b16 %v72
    %v115 = vunpack.c.l.b16 %v73
    %v116 = vunpack.c.l.b16 %v74
    %v117 = vunpack.c.l.b16 %v75
    %v118 = vunpack.c.l.b16 %v76
    %v119 = vunpack.c.l.b16 %v77
    %v120 = vunpack.c.l.b16 %v78
    %v121 = vunpack.c.l.b16 %v79
    %v122 = vunpack.c.l.b16 %v80
    %v123 = vunpack.c.l.b16 %v81
    %v124 = vunpack.c.l.b16 %v82
    %v125 = vunpack.c.l.b16 %v83
    %v126 = vunpack.c.l.b16 %v84
    %v127 = vunpack.c.l.b16 %v85
    %v128 = vpack.c.b16 %v113, %v112
    %v129 = vpack.c.b16 %v115, %v114
    %v130 = vpack.c.b16 %v117, %v116
    %v131 = vpack.c.b16 %v119, %v118
    %v132 = vpack.c.b16 %v121, %v120
    %v133 = vpack.c.b16 %v123, %v122
    %v134 = vpack.c.b16 %v125, %v124
    %v135 = vpack.c.b16 %v127, %v126
    %144 = vmatpush.bf16.msra.mxu0 %v135
    %145 = vmatpush.bf16.msra.mxu0 %v134
    %146 = vmatpush.bf16.msra.mxu0 %v133
    %147 = vmatpush.bf16.msra.mxu0 %v132
    %148 = vmatpush.bf16.msra.mxu0 %v131
    %149 = vmatpush.bf16.msra.mxu0 %v130
    %150 = vmatpush.bf16.msra.mxu0 %v129
    %151 = vmatpush.bf16.msra.mxu0 %v128
    %152 = vmatmul.bf16.gmra.mxu0 %v94
    %v153 = vpop.f32.mrf.mxu0
    %v154 = vadd.f32 %v88, %v153
    %v155 = vpop.f32.mrf.mxu0
    %v156 = vadd.f32 %v88, %v155
    %157 = vdwg.mxu0
    %v158 = vtanh.pop %v154
    %v159 = vtanh.pop %v156
    %v160 = vpack.c.bf16 %v159, %v158
    %v161 = vld [vmem:[#allocation7] sm:$0xf]
    %v162 = vld [vmem:[#allocation7 + $0x4] sm:$0xf]
    %v163 = vld [vmem:[#allocation7 + $0x8] sm:$0xf]
    %v164 = vld [vmem:[#allocation7 + $0xc] sm:$0xf]
    %v165 = vld [vmem:[#allocation7 + $0x10] sm:$0xf]
    %v166 = vld [vmem:[#allocation7 + $0x14] sm:$0xf]
    %v167 = vld [vmem:[#allocation7 + $0x18] sm:$0xf]
    %v168 = vld [vmem:[#allocation7 + $0x1c] sm:$0xf]
    %v169 = vld [vmem:[#allocation7 + $0x20] sm:$0xf]
    %v170 = vld [vmem:[#allocation7 + $0x24] sm:$0xf]
    %v171 = vld [vmem:[#allocation7 + $0x28] sm:$0xf]
    %v172 = vld [vmem:[#allocation7 + $0x2c] sm:$0xf]
    %v173 = vld [vmem:[#allocation7 + $0x30] sm:$0xf]
    %v174 = vld [vmem:[#allocation7 + $0x34] sm:$0xf]
    %v175 = vld [vmem:[#allocation7 + $0x38] sm:$0xf]
    %v176 = vld [vmem:[#allocation7 + $0x3c] sm:$0xf]
    %v177 = vld [vmem:[%s4] sm:$0x1]
    %v179 = vperm.slane %v177, 0
    %v197 = vunpack.c.l.b16 %v161
    %v198 = vunpack.c.l.b16 %v162
    %v199 = vunpack.c.l.b16 %v163
    %v200 = vunpack.c.l.b16 %v164
    %v201 = vunpack.c.l.b16 %v165
    %v202 = vunpack.c.l.b16 %v166
    %v203 = vunpack.c.l.b16 %v167
    %v204 = vunpack.c.l.b16 %v168
    %v205 = vunpack.c.l.b16 %v169
    %v206 = vunpack.c.l.b16 %v170
    %v207 = vunpack.c.l.b16 %v171
    %v208 = vunpack.c.l.b16 %v172
    %v209 = vunpack.c.l.b16 %v173
    %v210 = vunpack.c.l.b16 %v174
    %v211 = vunpack.c.l.b16 %v175
    %v212 = vunpack.c.l.b16 %v176
    %v213 = vpack.c.b16 %v198, %v197
    %v214 = vpack.c.b16 %v200, %v199
    %v215 = vpack.c.b16 %v202, %v201
    %v216 = vpack.c.b16 %v204, %v203
    %v217 = vpack.c.b16 %v206, %v205
    %v218 = vpack.c.b16 %v208, %v207
    %v219 = vpack.c.b16 %v210, %v209
    %v220 = vpack.c.b16 %v212, %v211
    %229 = vmatpush.bf16.msra.mxu0 %v220
    %230 = vmatpush.bf16.msra.mxu0 %v219
    %231 = vmatpush.bf16.msra.mxu0 %v218
    %232 = vmatpush.bf16.msra.mxu0 %v217
    %233 = vmatpush.bf16.msra.mxu0 %v216
    %234 = vmatpush.bf16.msra.mxu0 %v215
    %235 = vmatpush.bf16.msra.mxu0 %v214
    %236 = vmatpush.bf16.msra.mxu0 %v213
    %237 = vmatmul.bf16.gmra.mxu0 %v160
    %v238 = vpop.f32.mrf.mxu0
    %v239 = vadd.f32 %v179, %v238
    %v240 = vpop.f32.mrf.mxu0
    %v241 = vadd.f32 %v179, %v240
    %242 = vdwg.mxu0
    %v243 = vpack.c.bf16 %v239, %v239
    %v244 = vpack.c.bf16 %v241, %v241
    %245 = vst [vmem:[#allocation8] sm:$0xf] %v243
    %246 = vst [vmem:[#allocation8 + $0x4] sm:$0xf] %v244
    // Predicated region
    $region34: #{tpu_custom_call.1} parent=1 // pred_check
      _
    $region35: #{tpu_custom_call.1} parent=1 // pred_check_branch
      %248 = sbr.rel (0) target = $region37
    $region36: #{tpu_custom_call.1} parent=1 // pred_region
      %250 = vsyncadd [#allocation4], 0
      %s251 = sshll.u32 [#allocation8], 4
      %s252 = int_to_ptr.vmem [resolvable:$true] %s251
      %s253 = sshll.u32 %s5, 4
      %s254 = int_to_ptr.hbm [resolvable:$true] %s253
      %259 = dma.vmem_to_hbm [thread:$0]  %s252, 128, %s254, [#allocation4], 64, 64, 4
    $region37: #{tpu_custom_call.1} parent=1 // pred_fallthru
      _
    // Predicated region
    $region38: #{tpu_custom_call.1} parent=1 // pred_check
      _
    $region39: #{tpu_custom_call.1} parent=1 // pred_check_branch
      %261 = sbr.rel (0) target = $region41
    $region40: #{tpu_custom_call.1} parent=1 // pred_region
      %263 = dma.done [#allocation4], 128
    $region41: #{tpu_custom_call.1} parent=1 // pred_fallthru
      _
    %264 = vsyncpa [#allocation3], 1
    %265 = vsyncpa [#allocation6], 1
    %266 = vsyncpa [#allocation4], 1

</llo_original>
